<compile_context>
chip_gen: v7x
topology: tpu7x:2x2x1
jax: 0.10.0
libtpu: 0.0.40
codegen_flags: <defaults>
</compile_context>

<pallas_src>
import functools

import jax
import jax.numpy as jnp
from jax.experimental import pallas as pl
from jax.experimental.pallas import tpu as pltpu

OUT_SCALE = 0.001


def _xcorr_kernel(x_ref, zb_ref, o_ref, *, hz, ho, wo, wo_pad, hx_pad, g_tile,
                  out_scale):
    # x_ref:  (g_tile*hx_pad, wx*c)          bf16, rows of g_tile items stacked on M
    # zb_ref: (wx*c, (hz-1)*wo + wo_pad)     bf16, hz banded template rows packed on N
    # o_ref:  (g_tile, ho, wo_pad)           response maps (lanes >= wo are don't-care)
    #
    # Single MXU dot per grid step: M = g_tile*hx_pad, K = wx*c, N = hz bands.
    r = jnp.dot(x_ref[...], zb_ref[...], preferred_element_type=jnp.float32)
    # Split M back into (items, rows); layout-free because hx_pad % 8 == 0.
    r = r.reshape(g_tile, hx_pad, r.shape[-1])
    # Band reduction: out[i, p, q] = sum_dh r[i, p+dh, dh*wo + q] for q < wo.
    # Slices are a full wo_pad (128-multiple) wide so the final store is unmasked;
    # lanes q >= wo pick up values from neighbouring bands and are discarded by the
    # wrapper, so no in-kernel zero-padding is needed.
    acc = r[:, 0:ho, 0:wo_pad]
    for dh in range(1, hz):                       # static unroll, hz is small (e.g. 6)
        acc = acc + r[:, dh:dh + ho, dh * wo:dh * wo + wo_pad]
    o_ref[...] = (acc * out_scale).astype(o_ref.dtype)


def build_templates(z, wx, dtype=jnp.bfloat16):
    """Banded (Toeplitz-over-w) template weights; cacheable across frames.

    Returns zb of shape (nz, wx*c, (hz-1)*wo + wo_pad) with
        zb[k, (q+dw)*c + cc, dh*wo + q] = z[k, cc, dh, dw]   (zeros elsewhere)
    so that (x_row_major @ zb[k]) contracts the whole (dw, cc) sliding window on the
    MXU and packs all hz template rows along the matmul N axis. The trailing
    (wo_pad - wo) zero columns exist only so the in-kernel band slices stay in bounds.
    """
    nz, c, hz, wz = z.shape
    wo = wx - wz + 1
    wo_pad = -(-wo // 128) * 128
    n_pad = (hz - 1) * wo + wo_pad

    zrow = jnp.transpose(z, (0, 2, 3, 1)).reshape(nz, hz, wz * c)      # j = dw*c + cc
    m = jnp.arange(wx * c)[:, None]                                     # (wx*c, 1)
    q = jnp.arange(wo)[None, :]                                         # (1, wo)
    rel = m - q * c                                                     # j = m - q*c
    valid = (rel >= 0) & (rel < wz * c)
    gathered = jnp.take(zrow, jnp.clip(rel, 0, wz * c - 1), axis=-1)    # (nz,hz,wx*c,wo)
    zb = jnp.where(valid[None, None], gathered, jnp.zeros((), zrow.dtype))
    zb = jnp.transpose(zb, (0, 2, 1, 3)).reshape(nz, wx * c, hz * wo)   # bands on N
    zb = jnp.pad(zb, ((0, 0), (0, 0), (0, n_pad - hz * wo)))
    return zb.astype(dtype)


def _pick_group_tile(ng, hx_pad, nz, per_item_bytes, budget_bytes):
    """Items per grid step: target ~512 stacked MXU rows, fit the VMEM budget, and
    keep at least 2 total grid steps so v7x megacore can shard the work."""
    if ng <= 1:
        return 1
    g = min(ng, max(1, 512 // hx_pad))
    while g > 1 and g * per_item_bytes > budget_bytes:
        g -= 1
    while g > 1 and nz * (-(-ng // g)) < 2:
        g -= 1
    return max(g, 1)


def siamfc_forward(z, x, out_scale=OUT_SCALE, zb=None):
    """SiamFC forward: z (nz,c,hz,wz), x (nx,c,hx,wx) NCHW -> (nx, 1, ho, wo)."""
    nz, c, hz, wz = z.shape
    nx, cx, hx, wx = x.shape
    assert c == cx and nx % nz == 0
    ng = nx // nz
    ho, wo = hx - hz + 1, wx - wz + 1
    wxc = wx * c
    hx_pad = -(-hx // 8) * 8                 # sublane-aligned per-item row stride
    wo_pad = -(-wo // 128) * 128             # lane-dense output width
    n_pad = (hz - 1) * wo + wo_pad           # RHS / result N extent

    if zb is None:
        # NOTE: in a tracking loop cache this (and pass zb=) — z changes rarely.
        zb = build_templates(z, wx)
    assert zb.shape == (nz, wxc, n_pad)

    # --- VMEM budget & tile sizing (per-generation physical VMEM) -------------
    try:
        vmem_cap = int(getattr(pltpu.get_tpu_info(), "vmem_capacity_bytes", 64 << 20))
    except Exception:  # pragma: no cover - conservative fallback (v7x per-TC VMEM)
        vmem_cap = 64 << 20
    vmem_budget = (vmem_cap * 3) // 4        # ~48 MiB on v7x, ~96 MiB on v5e/v6e
    out_isz = jnp.dtype(x.dtype).itemsize
    zb_blk = 2 * wxc * n_pad * 2                                   # double-buffered bf16
    per_item = 2 * (hx_pad * wxc * 2 + ho * wo_pad * out_isz)      # x + out, 2 buffers
    g_budget = max(vmem_budget - zb_blk - (4 << 20), per_item)
    g_tile = _pick_group_tile(ng, hx_pad, nz, per_item, g_budget)
    ng_pad = -(-ng // g_tile) * g_tile
    need = zb_blk + g_tile * per_item
    vmem_limit = int(min(max(need + (8 << 20), 32 << 20), vmem_cap - (4 << 20)))

    # --- Layout plumbing (single fused pass over x, incl. bf16 downcast) ------
    # NCHW -> grouped-by-template (nz, ng, hx, wx*c): items sharing a template are
    # contiguous so their rows stack directly onto the matmul M axis.
    # TODO(synk): accept NHWC activations from the backbone to remove this HBM pass.
    xg = x.reshape(ng, nz, c, hx, wx)
    xg = jnp.transpose(xg, (1, 0, 3, 4, 2)).reshape(nz, ng, hx, wxc)
    xg = xg.astype(jnp.bfloat16)
    if hx_pad != hx or ng_pad != ng:
        xg = jnp.pad(xg, ((0, 0), (0, ng_pad - ng), (0, hx_pad - hx), (0, 0)))
    xg = xg.reshape(nz, ng_pad * hx_pad, wxc)

    kernel = functools.partial(
        _xcorr_kernel, hz=hz, ho=ho, wo=wo, wo_pad=wo_pad, hx_pad=hx_pad,
        g_tile=g_tile, out_scale=out_scale)

    out = pl.pallas_call(
        kernel,
        out_shape=jax.ShapeDtypeStruct((nz, ng_pad, ho, wo_pad), x.dtype),
        grid_spec=pltpu.PrefetchScalarGridSpec(
            num_scalar_prefetch=0,
            grid=(nz, ng_pad // g_tile),
            in_specs=[
                # stacked item rows for group tile t of template k
                pl.BlockSpec((None, g_tile * hx_pad, wxc), lambda k, t: (k, t, 0)),
                # banded weights of template k (constant over t -> fetched nz times)
                pl.BlockSpec((None, wxc, n_pad), lambda k, t: (k, 0, 0)),
            ],
            out_specs=pl.BlockSpec((None, g_tile, ho, wo_pad),
                                   lambda k, t: (k, t, 0, 0)),
        ),
        compiler_params=pltpu.CompilerParams(
            dimension_semantics=("parallel", "parallel"),
            vmem_limit_bytes=vmem_limit,
        ),
    )(xg, zb)

    out = out[:, :ng, :, :wo]                                  # drop lane / group pad
    out = jnp.transpose(out, (1, 0, 2, 3)).reshape(nx, 1, ho, wo)
    return out


def _ref_siamfc(z, x, out_scale=OUT_SCALE):
    """Pure-JAX mirror of the PyTorch module (grouped valid conv2d, f32)."""
    nz, c, hz, wz = z.shape
    nx, _, hx, wx = x.shape
    xr = x.reshape(nx // nz, nz * c, hx, wx)
    out = jax.lax.conv_general_dilated(
        xr.astype(jnp.float32), z.astype(jnp.float32),
        window_strides=(1, 1), padding="VALID",
        dimension_numbers=("NCHW", "OIHW", "NCHW"),
        feature_group_count=nz,
        precision=jax.lax.Precision.HIGHEST)
    return out.reshape(nx, 1, out.shape[-2], out.shape[-1]) * out_scale


if __name__ == "__main__":
    key = jax.random.PRNGKey(0)
    kz, kx = jax.random.split(key)

    # Small SiamFC-like shapes: 2 templates, 4 search images (2 per template),
    # 4 channels, exemplar 6x6, search 16x16 -> response 11x11.
    nz, nx, c = 2, 4, 4
    z = jax.random.normal(kz, (nz, c, 6, 6), dtype=jnp.float32)
    x = jax.random.normal(kx, (nx, c, 16, 16), dtype=jnp.float32)

    fwd = jax.jit(siamfc_forward)
    out = jax.block_until_ready(fwd(z, x))
    ref = _ref_siamfc(z, x)

    assert out.shape == (nx, 1, 11, 11), out.shape
    err = float(jnp.max(jnp.abs(out - ref)))
    # bf16 MXU operands with f32 accumulation; with out_scale=1e-3 the absolute
    # error stays ~1e-4 at these reduction sizes.
    assert err < 2e-3, err

    print("KERNEL_OK")
</pallas_src>

<mosaic_0001>
module attributes {stable_mosaic.version = 11 : i64} {
  func.func @_xcorr_kernel(%arg0: i32, %arg1: i32, %arg2: memref<1x32x64xbf16, #tpu.memory_space<vmem>>, %arg3: memref<1x64x183xbf16, #tpu.memory_space<vmem>>, %arg4: memref<1x2x11x128xf32, #tpu.memory_space<vmem>>) attributes {dimension_semantics = [#tpu.dimension_semantics<parallel>, #tpu.dimension_semantics<parallel>], iteration_bounds = array<i64: 2, 1>, scalar_prefetch = 0 : i64, scratch_operands = 0 : i64, tpu.core_type = #tpu.core_type<tc>, window_params = [{transform_indices = @transform_0, window_bounds = array<i64: 1, 32, 64>}, {transform_indices = @transform_1, window_bounds = array<i64: 1, 64, 183>}, {transform_indices = @transform_2, window_bounds = array<i64: 1, 2, 11, 128>}]} {
    %c0 = arith.constant 0 : index
    %c0_0 = arith.constant 0 : index
    %c0_1 = arith.constant 0 : index
    %0 = vector.load %arg2[%c0, %c0_0, %c0_1] : memref<1x32x64xbf16, #tpu.memory_space<vmem>>, vector<1x32x64xbf16>
    %1 = vector.shape_cast %0 : vector<1x32x64xbf16> to vector<32x64xbf16>
    %c0_2 = arith.constant 0 : index
    %c0_3 = arith.constant 0 : index
    %c0_4 = arith.constant 0 : index
    %2 = vector.load %arg3[%c0_2, %c0_3, %c0_4] : memref<1x64x183xbf16, #tpu.memory_space<vmem>>, vector<1x64x183xbf16>
    %3 = vector.shape_cast %2 : vector<1x64x183xbf16> to vector<64x183xbf16>
    %cst = arith.constant dense<0.000000e+00> : vector<32x183xf32>
    %4 = tpu.matmul %1, %3, %cst {dimension_numbers = #tpu.dot_dimension_numbers<[1], [0], [0], [1], [0, 0, 1, 1], [], []>} : vector<32x64xbf16>, vector<64x183xbf16>, vector<32x183xf32> -> vector<32x183xf32>
    %5 = vector.shape_cast %4 : vector<32x183xf32> to vector<2x16x183xf32>
    %6 = vector.extract_strided_slice %5 {offsets = [0, 0, 0], sizes = [2, 11, 128], strides = [1, 1, 1]} : vector<2x16x183xf32> to vector<2x11x128xf32>
    %7 = vector.extract_strided_slice %5 {offsets = [0, 1, 11], sizes = [2, 11, 128], strides = [1, 1, 1]} : vector<2x16x183xf32> to vector<2x11x128xf32>
    %8 = arith.addf %6, %7 : vector<2x11x128xf32>
    %9 = vector.extract_strided_slice %5 {offsets = [0, 2, 22], sizes = [2, 11, 128], strides = [1, 1, 1]} : vector<2x16x183xf32> to vector<2x11x128xf32>
    %10 = arith.addf %8, %9 : vector<2x11x128xf32>
    %11 = vector.extract_strided_slice %5 {offsets = [0, 3, 33], sizes = [2, 11, 128], strides = [1, 1, 1]} : vector<2x16x183xf32> to vector<2x11x128xf32>
    %12 = arith.addf %10, %11 : vector<2x11x128xf32>
    %13 = vector.extract_strided_slice %5 {offsets = [0, 4, 44], sizes = [2, 11, 128], strides = [1, 1, 1]} : vector<2x16x183xf32> to vector<2x11x128xf32>
    %14 = arith.addf %12, %13 : vector<2x11x128xf32>
    %15 = vector.extract_strided_slice %5 {offsets = [0, 5, 55], sizes = [2, 11, 128], strides = [1, 1, 1]} : vector<2x16x183xf32> to vector<2x11x128xf32>
    %16 = arith.addf %14, %15 : vector<2x11x128xf32>
    %cst_5 = arith.constant 1.000000e-03 : f32
    %17 = vector.broadcast %cst_5 : f32 to vector<2x11x128xf32>
    %18 = arith.mulf %16, %17 : vector<2x11x128xf32>
    %c0_6 = arith.constant 0 : index
    %c0_7 = arith.constant 0 : index
    %c0_8 = arith.constant 0 : index
    %c0_9 = arith.constant 0 : index
    %19 = vector.load %arg4[%c0_6, %c0_7, %c0_8, %c0_9] : memref<1x2x11x128xf32, #tpu.memory_space<vmem>>, vector<1x2x11x128xf32>
    %20 = vector.shape_cast %19 : vector<1x2x11x128xf32> to vector<2x11x128xf32>
    %21 = vector.shape_cast %18 : vector<2x11x128xf32> to vector<1x2x11x128xf32>
    tpu.vector_store %arg4[%c0_6, %c0_7, %c0_8, %c0_9], %21 {strides = array<i32>} : memref<1x2x11x128xf32, #tpu.memory_space<vmem>>, vector<1x2x11x128xf32>,
    return
  }
  func.func @transform_0(%arg0: i32, %arg1: i32) -> (i32, i32, i32) {
    %c0_i32 = arith.constant 0 : i32
    %c0_i32_0 = arith.constant 0 : i32
    return %arg0, %arg1, %c0_i32 : i32, i32, i32
  }
  func.func @transform_1(%arg0: i32, %arg1: i32) -> (i32, i32, i32) {
    %c0_i32 = arith.constant 0 : i32
    %c0_i32_0 = arith.constant 0 : i32
    %c0_i32_1 = arith.constant 0 : i32
    return %arg0, %c0_i32, %c0_i32_0 : i32, i32, i32
  }
  func.func @transform_2(%arg0: i32, %arg1: i32) -> (i32, i32, i32, i32) {
    %c0_i32 = arith.constant 0 : i32
    %c0_i32_0 = arith.constant 0 : i32
    %c0_i32_1 = arith.constant 0 : i32
    return %arg0, %arg1, %c0_i32, %c0_i32_0 : i32, i32, i32, i32
  }
}

</mosaic_0001>

<llo_original>
// kernel: siamfc_forward.1
$region0: #{siamfc_forward.1}
  #allocation0 [shape = 'u32[]', space=smem, size = 0x4, offset = 0x4, fixed_abs, tag = 'smem constant byte address 0x4 - core index']
  #allocation1 [shape = 'u32[144,128]{1,0:T(1,128)}', space=vmem, size = 0x12000, scoped, tag = 'internal scratch']
  %s0 = inlined_call_operand.vmem [shape: bf16[2,32,64], index: 0, kind: input, shape index: {}]
  %s1 = inlined_call_operand.vmem [shape: bf16[2,64,183], index: 1, kind: input, shape index: {}]
  %s2 = inlined_call_operand.vmem [shape: f32[2,2,11,128], index: 2, kind: output, shape index: {}]
  %s3 = sld [smem:[#allocation0]]
  $region41: #{siamfc_forward.1} parent=0
    _
  %s5 = ssub.s32 1, %s3
  %s6 = scalar_select 0, %s5, %s3
  loop: start=0, step=1, limit=4
  $region2: #{siamfc_forward.1} parent=0 // loop_pre_header
    _
  $region3: #{siamfc_forward.1} parent=0 // loop_header
    %s8 = sphi 0, %s12
    %p9 = scmp.ge.s32.totalorder %s8, 4
    %s15 = sphi 0, %s27
    %s16 = sphi 0, %s23
    %s17 = sphi 0, %s15
    %s18 = sphi 0, %s16
    %s19 = sphi 0, %s17
    %s20 = sphi 0, %s18
    %s32 = sphi 0, %s34
    %s35 = sphi 0, %s32
    %s36 = sphi 0, %s35
    %s52 = sphi 0, %s36
    %s58 = sphi 0, %s60
    %s61 = sphi 0, %s58
    %s62 = sphi 0, %s61
    %s78 = sphi 0, %s62
    %s86 = sphi 0, %s88
    %s89 = sphi 0, %s86
    %s90 = sphi 0, %s89
    %s106 = sphi 0, %s90
  $region4: #{siamfc_forward.1} parent=0 // loop_header_branch
    %11 = sbr.rel (%p9) target = $region8
  $region5: #{siamfc_forward.1} parent=0 // loop_body
    %s13 = ssub.s32 %s8, 1
    %s14 = ssub.s32 %s8, 2
    %s21 = sadd.s32 1, %s16
    %p22 = scmp.ge.s32.totalorder %s21, 1
    %s23 = scalar_select %p22, 0, %s21
    %s24 = sadd.s32 1, %s15
    %s25 = scalar_select %p22, %s24, %s15
    %p26 = scmp.ge.s32.totalorder %s25, 2
    %s27 = scalar_select %p26, 0, %s25
    %s28 = ssub.s32 %s15, %s27
    %s29 = ssub.s32 %s16, %s23
    %s30 = sor.u32 %s28, %s29
    %p31 = scmp.eq.s32.totalorder %s30, 0
    %s33 = sadd.s32 %s32, 1
    %s34 = scalar_select %p31, %s32, %s33
    %p37 = pneg %p31
    %p38 = scmp.eq.s32.totalorder %s8, 1
    %p39 = por %p37, %p38
    %p40 = scmp.ne.s32.totalorder %s32, %s35
    %p41 = scmp.eq.s32.totalorder %s8, 0
    %p42 = por %p40, %p41
    %p43 = scmp.ne.s32.totalorder %s32, %s35
    %p44 = scmp.eq.s32.totalorder %s13, 1
    %p45 = por %p43, %p44
    %p46 = scmp.ne.s32.totalorder %s35, %s36
    %p47 = scmp.eq.s32.totalorder %s13, 0
    %p48 = por %p46, %p47
    %p49 = scmp.ne.s32.totalorder %s35, %s36
    %p50 = scmp.eq.s32.totalorder %s14, 1
    %p51 = por %p49, %p50
    %p53 = scmp.ne.s32.totalorder %s36, %s52
    %p54 = scmp.eq.s32.totalorder %s14, 0
    %p55 = por %p53, %p54
    %s56 = ssub.s32 %s15, %s27
    %p57 = scmp.eq.s32.totalorder %s56, 0
    %s59 = sadd.s32 %s58, 1
    %s60 = scalar_select %p57, %s58, %s59
    %p63 = pneg %p57
    %p64 = scmp.eq.s32.totalorder %s8, 1
    %p65 = por %p63, %p64
    %p66 = scmp.ne.s32.totalorder %s58, %s61
    %p67 = scmp.eq.s32.totalorder %s8, 0
    %p68 = por %p66, %p67
    %p69 = scmp.ne.s32.totalorder %s58, %s61
    %p70 = scmp.eq.s32.totalorder %s13, 1
    %p71 = por %p69, %p70
    %p72 = scmp.ne.s32.totalorder %s61, %s62
    %p73 = scmp.eq.s32.totalorder %s13, 0
    %p74 = por %p72, %p73
    %p75 = scmp.ne.s32.totalorder %s61, %s62
    %p76 = scmp.eq.s32.totalorder %s14, 1
    %p77 = por %p75, %p76
    %p79 = scmp.ne.s32.totalorder %s62, %s78
    %p80 = scmp.eq.s32.totalorder %s14, 0
    %p81 = por %p79, %p80
    %s82 = ssub.s32 %s15, %s27
    %s83 = ssub.s32 %s16, %s23
    %s84 = sor.u32 %s82, %s83
    %p85 = scmp.eq.s32.totalorder %s84, 0
    %s87 = sadd.s32 %s86, 1
    %s88 = scalar_select %p85, %s86, %s87
    %p91 = pneg %p85
    %p92 = scmp.eq.s32.totalorder %s8, 1
    %p93 = por %p91, %p92
    %p94 = scmp.ne.s32.totalorder %s86, %s89
    %p95 = scmp.eq.s32.totalorder %s8, 0
    %p96 = por %p94, %p95
    %p97 = scmp.ne.s32.totalorder %s86, %s89
    %p98 = scmp.eq.s32.totalorder %s13, 1
    %p99 = por %p97, %p98
    %p100 = scmp.ne.s32.totalorder %s89, %s90
    %p101 = scmp.eq.s32.totalorder %s13, 0
    %p102 = por %p100, %p101
    %p103 = scmp.ne.s32.totalorder %s89, %s90
    %p104 = scmp.eq.s32.totalorder %s14, 1
    %p105 = por %p103, %p104
    %p107 = scmp.ne.s32.totalorder %s90, %s106
    %p108 = scmp.eq.s32.totalorder %s14, 0
    %p109 = por %p107, %p108
    %p110 = scmp.le.s32.totalorder 1, %s8
    %p111 = scmp.lt.s32.totalorder %s8, 3
    %p112 = pnand %p110, %p111
    %p113 = pneg %p112
    // Predicated region
    $region9: #{siamfc_forward.1} parent=5 // pred_check
      _
    $region10: #{siamfc_forward.1} parent=5 // pred_check_branch
      %115 = sbr.rel (%p112) target = $region12
    $region11: #{siamfc_forward.1} parent=5 // pred_region
      %s116 = ssub.s32 %s8, 1
    $region12: #{siamfc_forward.1} parent=5 // pred_fallthru
      _
    %p117 = scmp.lt.s32.totalorder %s8, 2
    // Predicated region
    $region13: #{siamfc_forward.1} parent=5 // pred_check
      %p118 = pneg %p117
    $region14: #{siamfc_forward.1} parent=5 // pred_check_branch
      %120 = sbr.rel (%p118) target = $region16
    $region15: #{siamfc_forward.1} parent=5 // pred_region
      // Predicated region
      $region17: #{siamfc_forward.1} parent=15 // pred_check
        %p121 = pneg %p42
      $region18: #{siamfc_forward.1} parent=15 // pred_check_branch
        %123 = sbr.rel (%p121) target = $region20
      $region19: #{siamfc_forward.1} parent=15 // pred_region
        %s124 = smul.u32 4, %s16
        %p125 = scmp.lt.s32.totalorder %s15, 1
        %s126 = scalar_select %p125, %s15, 1
        %p127 = scmp.lt.s32.totalorder %s124, 3
        %s128 = scalar_select %p127, %s124, 3
        %s129 = smul.addr %s126, 4
        %s130 = sadd.s32 %s128, %s129
        %s131 = smul.addr %s130, 4
        %s132 = scalar_lea.vmem %s0, %s131
        %s133 = smul.u32 4, %s16
      $region20: #{siamfc_forward.1} parent=15 // pred_fallthru
        _
      // Predicated region
      $region21: #{siamfc_forward.1} parent=15 // pred_check
        %p134 = pneg %p68
      $region22: #{siamfc_forward.1} parent=15 // pred_check_branch
        %136 = sbr.rel (%p134) target = $region24
      $region23: #{siamfc_forward.1} parent=15 // pred_region
        %p137 = scmp.lt.s32.totalorder %s15, 1
        %s138 = scalar_select %p137, %s15, 1
        %s139 = smul.addr %s138, 16
        %s140 = smul.addr %s139, 4
        %s141 = scalar_lea.vmem %s1, %s140
      $region24: #{siamfc_forward.1} parent=15 // pred_fallthru
        _
    $region16: #{siamfc_forward.1} parent=5 // pred_fallthru
      _
    %p142 = scmp.le.s32.totalorder 1, %s8
    %p143 = scmp.lt.s32.totalorder %s8, 3
    %p144 = pnand %p142, %p143
    %p145 = pneg %p144
    // Predicated region
    $region25: #{siamfc_forward.1} parent=5 // pred_check
      _
    $region26: #{siamfc_forward.1} parent=5 // pred_check_branch
      %147 = sbr.rel (%p144) target = $region28
    $region27: #{siamfc_forward.1} parent=5 // pred_region
      %s148 = ssub.s32 %s8, 1
      %s149 = smul.u32 4, %s18
      %p150 = scmp.lt.s32.totalorder %s17, 1
      %s151 = scalar_select %p150, %s17, 1
      %p152 = scmp.lt.s32.totalorder %s149, 3
      %s153 = scalar_select %p152, %s149, 3
      %s154 = smul.addr %s151, 4
      %s155 = sadd.s32 %s153, %s154
      %s156 = smul.addr %s155, 4
      %s157 = scalar_lea.vmem %s0, %s156
      %p158 = pneg %p48
      %p159 = pneg %p45
      %p160 = scmp.lt.s32.totalorder %s17, 1
      %s161 = scalar_select %p160, %s17, 1
      %s162 = smul.addr %s161, 16
      %s163 = smul.addr %s162, 4
      %s164 = scalar_lea.vmem %s1, %s163
      %p165 = pneg %p74
      %p166 = pneg %p71
      %p167 = pneg %p102
      %p168 = pneg %p99
      %s169 = smul.u32 2, %s18
      %p170 = scmp.lt.s32.totalorder %s17, 1
      %s171 = scalar_select %p170, %s17, 1
      %p172 = scmp.lt.s32.totalorder %s169, 1
      %s173 = scalar_select %p172, %s169, 1
      %s174 = smul.addr %s173, 2
      %s175 = smul.addr %s171, 4
      %s176 = sadd.s32 %s174, %s175
      %s177 = smul.addr %s176, 8
      %s178 = scalar_lea.vmem %s2, %s177
      %s179 = smul.u32 4, %s18
      %p180 = scmp.lt.s32.totalorder %s17, 1
      %s181 = scalar_select %p180, %s17, 1
      %p182 = scmp.lt.s32.totalorder %s179, 3
      %s183 = scalar_select %p182, %s179, 3
      %s184 = smul.addr %s181, 4
      %s185 = sadd.s32 %s183, %s184
      %s186 = smul.addr %s185, 4
      %s187 = scalar_lea.vmem %s0, %s186
      %s188 = smul.u32 4, %s18
      %p189 = scmp.lt.s32.totalorder %s17, 1
      %s190 = scalar_select %p189, %s17, 1
      %s191 = smul.addr %s190, 16
      %s192 = smul.addr %s191, 4
      %s193 = scalar_lea.vmem %s1, %s192
      %s194 = smul.u32 2, %s18
      %p195 = scmp.lt.s32.totalorder %s17, 1
      %s196 = scalar_select %p195, %s17, 1
      %p197 = scmp.lt.s32.totalorder %s194, 1
      %s198 = scalar_select %p197, %s194, 1
      %s199 = smul.addr %s198, 2
      %s200 = smul.addr %s196, 4
      %s201 = sadd.s32 %s199, %s200
      %s202 = smul.addr %s201, 8
      %s203 = scalar_lea.vmem %s2, %s202
      %s204 = smul.u32 2, %s18
      %v206 = vld [vmem:[%s187] sm:$0xf]
      %v207 = vld [vmem:[%s187 + $0x4] sm:$0xf]
      %v208 = vld [vmem:[%s187 + $0x8] sm:$0xf]
      %v209 = vld [vmem:[%s187 + $0xc] sm:$0xf]
      %v210 = vld [vmem:[%s193] sm:$0xff]
      %v211 = vld [vmem:[%s193 + $0x8] sm:$0xff]
      %v212 = vld [vmem:[%s193 + $0x10] sm:$0xff]
      %v213 = vld [vmem:[%s193 + $0x18] sm:$0xff]
      %v214 = vld [vmem:[%s193 + $0x20] sm:$0xff]
      %v215 = vld [vmem:[%s193 + $0x28] sm:$0xff]
      %v216 = vld [vmem:[%s193 + $0x30] sm:$0xff]
      %v217 = vld [vmem:[%s193 + $0x38] sm:$0xff]
      %v222 = vunpack.c.l.b16 %v206
      %v223 = vunpack.c.l.b16 %v207
      %v224 = vunpack.c.l.b16 %v208
      %v225 = vunpack.c.l.b16 %v209
      %v226 = vpack.c.b16 %v223, %v222
      %v227 = vpack.c.b16 %v225, %v224
      %v236 = vunpack.c.l.b16 %v210
      %v237 = vunpack.c.h.b16 %v210
      %v238 = vunpack.c.l.b16 %v211
      %v239 = vunpack.c.h.b16 %v211
      %v240 = vunpack.c.l.b16 %v212
      %v241 = vunpack.c.h.b16 %v212
      %v242 = vunpack.c.l.b16 %v213
      %v243 = vunpack.c.h.b16 %v213
      %v244 = vunpack.c.l.b16 %v214
      %v245 = vunpack.c.h.b16 %v214
      %v246 = vunpack.c.l.b16 %v215
      %v247 = vunpack.c.h.b16 %v215
      %v248 = vunpack.c.l.b16 %v216
      %v249 = vunpack.c.h.b16 %v216
      %v250 = vunpack.c.l.b16 %v217
      %v251 = vunpack.c.h.b16 %v217
      %v252 = vpack.c.b16 %v238, %v236
      %v253 = vpack.c.b16 %v239, %v237
      %v254 = vpack.c.b16 %v242, %v240
      %v255 = vpack.c.b16 %v243, %v241
      %v256 = vpack.c.b16 %v246, %v244
      %v257 = vpack.c.b16 %v247, %v245
      %v258 = vpack.c.b16 %v250, %v248
      %v259 = vpack.c.b16 %v251, %v249
      %vm268 = vcmask 523264
      %v270 = vsel %vm268, %v226, 0
      %v273 = vsel %vm268, %v227, 0
      %275 = vmatprep.subr.bf16.mxu0 %v253
      %276 = vmatpush1.bf16.msra.mxu0 %v252
      %277 = vmatprep.subr.bf16.mxu0 %v255
      %278 = vmatpush1.bf16.msra.mxu0 %v254
      %279 = vmatprep.subr.bf16.mxu0 %v257
      %280 = vmatpush1.bf16.msra.mxu0 %v256
      %281 = vmatprep.subr.bf16.mxu0 %v259
      %282 = vmatpush1.bf16.msra.mxu0 %v258
      %283 = vmatprep.subr.bf16.mxu0 0
      %284 = vmatpush1.bf16.msra.mxu0 0
      %285 = vmatprep.subr.bf16.mxu0 0
      %286 = vmatpush1.bf16.msra.mxu0 0
      %287 = vmatprep.subr.bf16.mxu0 0
      %288 = vmatpush1.bf16.msra.mxu0 0
      %289 = vmatprep.subr.bf16.mxu0 0
      %290 = vmatpush1.bf16.msra.mxu0 0
      %291 = vmatprep.subr.bf16.mxu0 0
      %292 = vmatpush1.bf16.msra.mxu0 0
      %293 = vmatprep.subr.bf16.mxu0 0
      %294 = vmatpush1.bf16.msra.mxu0 0
      %295 = vmatprep.subr.bf16.mxu0 0
      %296 = vmatpush1.bf16.msra.mxu0 0
      %297 = vmatprep.subr.bf16.mxu0 0
      %298 = vmatpush1.bf16.msra.mxu0 0
      %299 = vmatprep.subr.bf16.mxu0 0
      %300 = vmatpush1.bf16.msra.mxu0 0
      %301 = vmatprep.subr.bf16.mxu0 0
      %302 = vmatpush1.bf16.msra.mxu0 0
      %303 = vmatprep.subr.bf16.mxu0 0
      %304 = vmatpush1.bf16.msra.mxu0 0
      %305 = vmatprep.subr.bf16.mxu0 0
      %306 = vmatpush1.bf16.msra.mxu0 0
      %307 = vmatprep.mubr.bf16.mxu0 0
      %308 = vmatmul.mubr.bf16.gmra.mrb[0].mxu0 %v270
      %v309 = vpop.f32.mrb[0].mxu0
      %v310 = vadd.f32 0.0, %v309
      %v311 = vpop.f32.mrb[0].mxu0
      %v312 = vadd.f32 0.0, %v311
      %v313 = vpop.f32.mrb[0].mxu0
      %v314 = vadd.f32 0.0, %v313
      %v315 = vpop.f32.mrb[0].mxu0
      %v316 = vadd.f32 0.0, %v315
      %317 = vmatprep.mubr.bf16.mxu0 0
      %318 = vmatmul.mubr.bf16.gmra.mrb[0].mxu0 %v273
      %v319 = vpop.f32.mrb[0].mxu0
      %v320 = vadd.f32 0.0, %v319
      %v321 = vpop.f32.mrb[0].mxu0
      %v322 = vadd.f32 0.0, %v321
      %v323 = vpop.f32.mrb[0].mxu0
      %v324 = vadd.f32 0.0, %v323
      %v325 = vpop.f32.mrb[0].mxu0
      %v326 = vadd.f32 0.0, %v325
      %327 = vdwg.mxu0
      %vm336 = vcmask 1046528
      %v337 = vrot.slane %v310, 1
      %v338 = vrot.slane %v314, 1
      %v339 = vsel %vm336, %v337, %v338
      %v340 = vrot.slane %v312, 1
      %v341 = vrot.slane %v316, 1
      %v342 = vsel %vm336, %v340, %v341
      %v343 = vrot.slane %v320, 1
      %v344 = vrot.slane %v324, 1
      %v345 = vsel %vm336, %v343, %v344
      %v346 = vrot.slane %v322, 1
      %v347 = vrot.slane %v326, 1
      %v348 = vsel %vm336, %v346, %v347
      %349 = vrot.lane.b32.xlu0 %v339, 117
      %v350 = vpop.permute.xlu0 %349
      %351 = vrot.lane.b32.xlu0 %v342, 117
      %v352 = vpop.permute.xlu0 %351
      %353 = vrot.lane.b32.xlu0 %v338, 117
      %v354 = vpop.permute.xlu0 %353
      %355 = vrot.lane.b32.xlu0 %v341, 117
      %v356 = vpop.permute.xlu0 %355
      %357 = vrot.lane.b32.xlu0 %v345, 117
      %v358 = vpop.permute.xlu0 %357
      %359 = vrot.lane.b32.xlu0 %v348, 117
      %v360 = vpop.permute.xlu0 %359
      %361 = vrot.lane.b32.xlu0 %v344, 117
      %v362 = vpop.permute.xlu0 %361
      %363 = vrot.lane.b32.xlu0 %v347, 117
      %v364 = vpop.permute.xlu0 %363
      %vm365 = vcmask 957440
      %v366 = vsel %vm365, %v350, %v352
      %v367 = vsel %vm365, %v354, %v356
      %v368 = vsel %vm365, %v358, %v360
      %v369 = vsel %vm365, %v362, %v364
      %v374 = vadd.f32 %v310, %v366
      %v375 = vadd.f32 %v314, %v367
      %v376 = vadd.f32 %v320, %v368
      %v377 = vadd.f32 %v324, %v369
      %vm378 = vcmask 1045504
      %v379 = vrot.slane %v310, 2
      %v380 = vrot.slane %v314, 2
      %v381 = vsel %vm378, %v379, %v380
      %v382 = vrot.slane %v312, 2
      %v383 = vrot.slane %v316, 2
      %v384 = vsel %vm378, %v382, %v383
      %v385 = vrot.slane %v320, 2
      %v386 = vrot.slane %v324, 2
      %v387 = vsel %vm378, %v385, %v386
      %v388 = vrot.slane %v322, 2
      %v389 = vrot.slane %v326, 2
      %v390 = vsel %vm378, %v388, %v389
      %391 = vrot.lane.b32.xlu0 %v381, 106
      %v392 = vpop.permute.xlu0 %391
      %393 = vrot.lane.b32.xlu0 %v384, 106
      %v394 = vpop.permute.xlu0 %393
      %395 = vrot.lane.b32.xlu0 %v380, 106
      %v396 = vpop.permute.xlu0 %395
      %397 = vrot.lane.b32.xlu0 %v383, 106
      %v398 = vpop.permute.xlu0 %397
      %399 = vrot.lane.b32.xlu0 %v387, 106
      %v400 = vpop.permute.xlu0 %399
      %401 = vrot.lane.b32.xlu0 %v390, 106
      %v402 = vpop.permute.xlu0 %401
      %403 = vrot.lane.b32.xlu0 %v386, 106
      %v404 = vpop.permute.xlu0 %403
      %405 = vrot.lane.b32.xlu0 %v389, 106
      %v406 = vpop.permute.xlu0 %405
      %vm407 = vcmask 867328
      %v408 = vsel %vm407, %v392, %v394
      %v409 = vsel %vm407, %v396, %v398
      %v410 = vsel %vm407, %v400, %v402
      %v411 = vsel %vm407, %v404, %v406
      %v416 = vadd.f32 %v374, %v408
      %v417 = vadd.f32 %v375, %v409
      %v418 = vadd.f32 %v376, %v410
      %v419 = vadd.f32 %v377, %v411
      %vm420 = vcmask 1044480
      %v421 = vrot.slane %v310, 3
      %v422 = vrot.slane %v314, 3
      %v423 = vsel %vm420, %v421, %v422
      %v424 = vrot.slane %v312, 3
      %v425 = vrot.slane %v316, 3
      %v426 = vsel %vm420, %v424, %v425
      %v427 = vrot.slane %v320, 3
      %v428 = vrot.slane %v324, 3
      %v429 = vsel %vm420, %v427, %v428
      %v430 = vrot.slane %v322, 3
      %v431 = vrot.slane %v326, 3
      %v432 = vsel %vm420, %v430, %v431
      %433 = vrot.lane.b32.xlu0 %v423, 95
      %v434 = vpop.permute.xlu0 %433
      %435 = vrot.lane.b32.xlu0 %v426, 95
      %v436 = vpop.permute.xlu0 %435
      %437 = vrot.lane.b32.xlu0 %v422, 95
      %v438 = vpop.permute.xlu0 %437
      %439 = vrot.lane.b32.xlu0 %v425, 95
      %v440 = vpop.permute.xlu0 %439
      %441 = vrot.lane.b32.xlu0 %v429, 95
      %v442 = vpop.permute.xlu0 %441
      %443 = vrot.lane.b32.xlu0 %v432, 95
      %v444 = vpop.permute.xlu0 %443
      %445 = vrot.lane.b32.xlu0 %v428, 95
      %v446 = vpop.permute.xlu0 %445
      %447 = vrot.lane.b32.xlu0 %v431, 95
      %v448 = vpop.permute.xlu0 %447
      %vm449 = vcmask 777216
      %v450 = vsel %vm449, %v434, %v436
      %v451 = vsel %vm449, %v438, %v440
      %v452 = vsel %vm449, %v442, %v444
      %v453 = vsel %vm449, %v446, %v448
      %v458 = vadd.f32 %v416, %v450
      %v459 = vadd.f32 %v417, %v451
      %v460 = vadd.f32 %v418, %v452
      %v461 = vadd.f32 %v419, %v453
      %vm462 = vcmask 1043456
      %v463 = vrot.slane %v310, 4
      %v464 = vrot.slane %v314, 4
      %v465 = vsel %vm462, %v463, %v464
      %v466 = vrot.slane %v312, 4
      %v467 = vrot.slane %v316, 4
      %v468 = vsel %vm462, %v466, %v467
      %v469 = vrot.slane %v320, 4
      %v470 = vrot.slane %v324, 4
      %v471 = vsel %vm462, %v469, %v470
      %v472 = vrot.slane %v322, 4
      %v473 = vrot.slane %v326, 4
      %v474 = vsel %vm462, %v472, %v473
      %475 = vrot.lane.b32.xlu0 %v465, 84
      %v476 = vpop.permute.xlu0 %475
      %477 = vrot.lane.b32.xlu0 %v468, 84
      %v478 = vpop.permute.xlu0 %477
      %479 = vrot.lane.b32.xlu0 %v464, 84
      %v480 = vpop.permute.xlu0 %479
      %481 = vrot.lane.b32.xlu0 %v467, 84
      %v482 = vpop.permute.xlu0 %481
      %483 = vrot.lane.b32.xlu0 %v471, 84
      %v484 = vpop.permute.xlu0 %483
      %485 = vrot.lane.b32.xlu0 %v474, 84
      %v486 = vpop.permute.xlu0 %485
      %487 = vrot.lane.b32.xlu0 %v470, 84
      %v488 = vpop.permute.xlu0 %487
      %489 = vrot.lane.b32.xlu0 %v473, 84
      %v490 = vpop.permute.xlu0 %489
      %vm491 = vcmask 687104
      %v492 = vsel %vm491, %v476, %v478
      %v493 = vsel %vm491, %v480, %v482
      %v494 = vsel %vm491, %v484, %v486
      %v495 = vsel %vm491, %v488, %v490
      %v500 = vadd.f32 %v458, %v492
      %v501 = vadd.f32 %v459, %v493
      %v502 = vadd.f32 %v460, %v494
      %v503 = vadd.f32 %v461, %v495
      %vm504 = vcmask 1042432
      %v505 = vrot.slane %v310, 5
      %v506 = vrot.slane %v314, 5
      %v507 = vsel %vm504, %v505, %v506
      %v508 = vrot.slane %v312, 5
      %v509 = vrot.slane %v316, 5
      %v510 = vsel %vm504, %v508, %v509
      %v511 = vrot.slane %v320, 5
      %v512 = vrot.slane %v324, 5
      %v513 = vsel %vm504, %v511, %v512
      %v514 = vrot.slane %v322, 5
      %v515 = vrot.slane %v326, 5
      %v516 = vsel %vm504, %v514, %v515
      %517 = vrot.lane.b32.xlu0 %v507, 73
      %v518 = vpop.permute.xlu0 %517
      %519 = vrot.lane.b32.xlu0 %v510, 73
      %v520 = vpop.permute.xlu0 %519
      %521 = vrot.lane.b32.xlu0 %v506, 73
      %v522 = vpop.permute.xlu0 %521
      %523 = vrot.lane.b32.xlu0 %v509, 73
      %v524 = vpop.permute.xlu0 %523
      %525 = vrot.lane.b32.xlu0 %v513, 73
      %v526 = vpop.permute.xlu0 %525
      %527 = vrot.lane.b32.xlu0 %v516, 73
      %v528 = vpop.permute.xlu0 %527
      %529 = vrot.lane.b32.xlu0 %v512, 73
      %v530 = vpop.permute.xlu0 %529
      %531 = vrot.lane.b32.xlu0 %v515, 73
      %v532 = vpop.permute.xlu0 %531
      %vm533 = vcmask 596992
      %v534 = vsel %vm533, %v518, %v520
      %v535 = vsel %vm533, %v522, %v524
      %v536 = vsel %vm533, %v526, %v528
      %v537 = vsel %vm533, %v530, %v532
      %v542 = vadd.f32 %v500, %v534
      %v543 = vadd.f32 %v501, %v535
      %v544 = vadd.f32 %v502, %v536
      %v545 = vadd.f32 %v503, %v537
      %v546 = vmul.f32 %v542, 0.001
      %v547 = vmul.f32 %v543, 0.001
      %v548 = vmul.f32 %v544, 0.001
      %v549 = vmul.f32 %v545, 0.001
      %550 = vst [vmem:[%s203] sm:$0xff] %v546
      %551 = vst [vmem:[%s203 + $0x8] sm:$0x7] %v547
      %552 = vst [vmem:[%s203 + $0x10] sm:$0xff] %v548
      %553 = vst [vmem:[%s203 + $0x18] sm:$0x7] %v549
      %s554 = smul.u32 2, %s18
      %p555 = scmp.lt.s32.totalorder %s17, 1
      %s556 = scalar_select %p555, %s17, 1
      %p557 = scmp.lt.s32.totalorder %s554, 1
      %s558 = scalar_select %p557, %s554, 1
      %s559 = smul.addr %s558, 2
      %s560 = smul.addr %s556, 4
      %s561 = sadd.s32 %s559, %s560
      %s562 = smul.addr %s561, 8
      %s563 = scalar_lea.vmem %s2, %s562
      // Predicated region
      $region29: #{siamfc_forward.1} parent=27 // pred_check
        %p564 = pneg %p99
      $region30: #{siamfc_forward.1} parent=27 // pred_check_branch
        %566 = sbr.rel (%p564) target = $region32
      $region31: #{siamfc_forward.1} parent=27 // pred_region
        %s567 = smul.u32 2, %s18
      $region32: #{siamfc_forward.1} parent=27 // pred_fallthru
        _
    $region28: #{siamfc_forward.1} parent=5 // pred_fallthru
      _
    %p568 = scmp.le.s32.totalorder 2, %s8
    // Predicated region
    $region33: #{siamfc_forward.1} parent=5 // pred_check
      %p569 = pneg %p568
    $region34: #{siamfc_forward.1} parent=5 // pred_check_branch
      %571 = sbr.rel (%p569) target = $region36
    $region35: #{siamfc_forward.1} parent=5 // pred_region
      %s572 = ssub.s32 %s8, 2
      // Predicated region
      $region37: #{siamfc_forward.1} parent=35 // pred_check
        %p573 = pneg %p105
      $region38: #{siamfc_forward.1} parent=35 // pred_check_branch
        %575 = sbr.rel (%p573) target = $region40
      $region39: #{siamfc_forward.1} parent=35 // pred_region
        %s576 = smul.u32 2, %s20
        %p577 = scmp.lt.s32.totalorder %s19, 1
        %s578 = scalar_select %p577, %s19, 1
        %p579 = scmp.lt.s32.totalorder %s576, 1
        %s580 = scalar_select %p579, %s576, 1
        %s581 = smul.addr %s580, 2
        %s582 = smul.addr %s578, 4
        %s583 = sadd.s32 %s581, %s582
        %s584 = smul.addr %s583, 8
        %s585 = scalar_lea.vmem %s2, %s584
      $region40: #{siamfc_forward.1} parent=35 // pred_fallthru
        _
    $region36: #{siamfc_forward.1} parent=5 // pred_fallthru
      _
  $region6: #{siamfc_forward.1} parent=0 // loop_footer
    %s12 = sadd.s32 1, %s8
  $region7: #{siamfc_forward.1} parent=0 // loop_footer_branch
    %7 = sbr.rel target = $region3
  $region8: #{siamfc_forward.1} parent=0 // loop_exit
    _

</llo_original>
